<compile_context>
chip_gen: v6e
topology: v6e:2x2x1
jax: 0.10.0
libtpu: 0.0.40
codegen_flags: <defaults>
</compile_context>

<pallas_src>
import jax
import jax.numpy as jnp
from jax.experimental import pallas as pl
from jax.experimental.pallas import tpu as pltpu

_LANE = 128
_SUBLANE = 8
_TARGET_STEP_BYTES = 2 << 20     # ~2 MiB of X per grid step (amortizes ~0.35 us/step)
_VMEM_BUDGET_BYTES = 24 << 20    # cap on double-buffered VMEM footprint
_VMEM_LIMIT_BYTES = 32 << 20     # scoped-VMEM limit: raises v5e default, <= v6e/v7x defaults


def _round_up(x, m):
    return ((x + m - 1) // m) * m


def _policy_kernel(x_ref, w_ref, b_ref, o_ref):
    # x_ref: (TB, F) VMEM, native dtype -- batch rows on sublanes, features on lanes
    # w_ref: (1, F)  VMEM f32           -- target-set weights scattered into the F slots
    # b_ref: (1, 1)  SMEM f32           -- scalar bias
    # o_ref: (TB, 1) VMEM f32
    x = x_ref[...].astype(jnp.float32)             # upcast in vregs (no-op for f32 X)
    prod = x * w_ref[...]                          # VPU broadcast-multiply
    y = jnp.sum(prod, axis=1, keepdims=True)       # XLU lane reduce -> (TB, 1), exact f32
    o_ref[...] = (y + b_ref[0, 0]).astype(o_ref.dtype)


def continuous_policy_forward(X, target_set, weight, bias, *,
                              xla_small_batch_threshold=16384):
    """Pallas equivalent of ContinousPolicy.forward.

    X:          (B, F) float (any float dtype; streamed in native dtype)
    target_set: tuple/list of int feature indices (length T)
    weight:     (1, T) float   (nn.Linear weight layout)
    bias:       (1,)   float
    returns:    (B,)   float32
    """
    idx = tuple(int(i) for i in target_set)
    B, F = X.shape
    T = len(idx)
    if T == 0:
        raise ValueError("target_set must be non-empty")
    # Host-side validation: jnp.take / scatter clip OOB indices silently under
    # jit, unlike PyTorch indexing -- fail loudly instead.
    if any(i < 0 or i >= F for i in idx):
        raise ValueError(f"target_set indices must be in [0, {F}); got {idx}")

    idx_arr = jnp.asarray(idx, dtype=jnp.int32)
    w_vec = weight.reshape(-1).astype(jnp.float32)        # (T,)
    b_vec = bias.reshape(-1).astype(jnp.float32)          # (1,)

    # Small-batch fast path: one fused XLA gather+matvec beats the fixed
    # pallas_call overhead.  Cast AFTER the gather (never copy all of X).
    if B < xla_small_batch_threshold:
        cols = jnp.take(X, idx_arr, axis=1).astype(jnp.float32)   # (B, T)
        return cols @ w_vec + b_vec[0]

    # Fuse the column gather: scatter the T weights into an F-length vector.
    # `.add` (not `.set`) so duplicate target indices accumulate, matching the
    # repeated-column-gather semantics of X[:, target_set] @ w exactly.
    w_full = jnp.zeros((1, F), jnp.float32).at[0, idx_arr].add(w_vec)   # (1, F)
    b_sc = b_vec.reshape(1, 1)                                          # (1, 1) for SMEM

    # ---- batch-tile sizing -------------------------------------------------
    itemsize = jnp.dtype(X.dtype).itemsize
    row_hbm_bytes = F * itemsize                                # HBM bytes of X per row
    lanes_pad = _round_up(F, _LANE)
    # double-buffered VMEM per batch row: lane-padded X block + lane-padded (TB,1) f32 out
    vmem_per_row = 2 * lanes_pad * itemsize + 2 * _LANE * 4

    tb = min(_TARGET_STEP_BYTES // row_hbm_bytes,
             _VMEM_BUDGET_BYTES // vmem_per_row)
    tb = max(_SUBLANE, (tb // _SUBLANE) * _SUBLANE)
    if B <= _SUBLANE:
        tb = B                                   # block == full batch dim (always legal)
    else:
        tb = min(tb, (B // _SUBLANE) * _SUBLANE) # only the LAST block may be ragged
        # Prefer >=2 grid steps (v7x megacore) when each half still moves >=512 KiB.
        if tb >= B and (_round_up(-(-B // 2), _SUBLANE) * row_hbm_bytes) >= (512 << 10):
            tb = _round_up(-(-B // 2), _SUBLANE)

    grid = (pl.cdiv(B, tb),)

    out = pl.pallas_call(
        _policy_kernel,
        out_shape=jax.ShapeDtypeStruct((B, 1), jnp.float32),
        grid=grid,
        in_specs=[
            pl.BlockSpec((tb, F), lambda i: (i, 0)),               # row tiles of X
            pl.BlockSpec((1, F), lambda i: (0, 0)),                # weight, VMEM-resident
            pl.BlockSpec(memory_space=pltpu.MemorySpace.SMEM),     # bias scalar
        ],
        out_specs=pl.BlockSpec((tb, 1), lambda i: (i, 0)),
        compiler_params=pltpu.CompilerParams(
            dimension_semantics=("parallel",),        # shard batch across TCs on v7x
            vmem_limit_bytes=_VMEM_LIMIT_BYTES,
        ),
    )(X, w_full, b_sc)

    return out.reshape(B)                                          # .flatten()


if __name__ == "__main__":
    key = jax.random.PRNGKey(0)
    k_x, k_w, k_b, k_x2 = jax.random.split(key, 4)

    # Small shapes consistent with the module: X is (batch, features),
    # target_set picks a subset of feature columns.
    batch, features = 8, 16
    target_set = (0, 2, 5, 7, 9, 12)            # len(target_set) = 6
    T = len(target_set)

    X = jax.random.normal(k_x, (batch, features), dtype=jnp.float32)

    # Deterministic "nn.Linear(T, 1)" parameters (synthetic init, no checkpoint).
    bound = 1.0 / (T ** 0.5)
    weight = jax.random.uniform(k_w, (1, T), minval=-bound, maxval=bound,
                                dtype=jnp.float32)
    bias = jax.random.uniform(k_b, (1,), minval=-bound, maxval=bound,
                              dtype=jnp.float32)

    idx_arr = jnp.asarray(target_set)

    # Check 1: tiny batch, single block (force the Pallas path; threshold=0).
    mean = continuous_policy_forward(X, target_set, weight, bias,
                                     xla_small_batch_threshold=0)
    mean = jax.block_until_ready(mean)
    ref = (X[:, idx_arr] @ weight.T + bias).reshape(-1)
    assert mean.shape == (batch,)
    assert jnp.allclose(mean, ref, atol=1e-5, rtol=1e-5)

    # Check 2: multi-block grid with a ragged tail (B not tile-aligned).
    B2 = 1003
    X2 = jax.random.normal(k_x2, (B2, features), dtype=jnp.float32)
    mean2 = jax.block_until_ready(
        continuous_policy_forward(X2, target_set, weight, bias,
                                  xla_small_batch_threshold=0))
    ref2 = (X2[:, idx_arr] @ weight.T + bias).reshape(-1)
    assert mean2.shape == (B2,)
    assert jnp.allclose(mean2, ref2, atol=1e-5, rtol=1e-5)

    print("KERNEL_OK")
</pallas_src>

<mosaic_0001>
module attributes {stable_mosaic.version = 11 : i64} {
  func.func @_policy_kernel(%arg0: i32, %arg1: memref<8x16xf32, #tpu.memory_space<vmem>>, %arg2: memref<1x16xf32, #tpu.memory_space<vmem>>, %arg3: memref<1x1xf32, #tpu.memory_space<smem>>, %arg4: memref<8x1xf32, #tpu.memory_space<vmem>>) attributes {dimension_semantics = [#tpu.dimension_semantics<parallel>], iteration_bounds = array<i64: 1>, scalar_prefetch = 0 : i64, scratch_operands = 0 : i64, tpu.core_type = #tpu.core_type<tc>, window_params = [{transform_indices = @transform_0, window_bounds = array<i64: 8, 16>}, {pipeline_mode = #tpu.pipeline_mode<synchronous>, transform_indices = @transform_1, window_bounds = array<i64: 1, 16>}, {transform_indices = @transform_2, window_bounds = array<i64: 1, 1>}, {transform_indices = @transform_3, window_bounds = array<i64: 8, 1>}]} {
    %c0 = arith.constant 0 : index
    %c0_0 = arith.constant 0 : index
    %0 = vector.load %arg1[%c0, %c0_0] : memref<8x16xf32, #tpu.memory_space<vmem>>, vector<8x16xf32>
    %c0_1 = arith.constant 0 : index
    %c0_2 = arith.constant 0 : index
    %1 = vector.load %arg2[%c0_1, %c0_2] : memref<1x16xf32, #tpu.memory_space<vmem>>, vector<1x16xf32>
    %2 = vector.broadcast %1 : vector<1x16xf32> to vector<8x16xf32>
    %3 = arith.mulf %0, %2 : vector<8x16xf32>
    %cst = arith.constant dense<0.000000e+00> : vector<8xf32>
    %4 = vector.multi_reduction <add>, %3, %cst [1] : vector<8x16xf32> to vector<8xf32>
    %5 = vector.shape_cast %4 : vector<8xf32> to vector<8x1xf32>
    %c0_3 = arith.constant 0 : index
    %c0_4 = arith.constant 0 : index
    %6 = memref.load %arg3[%c0_3, %c0_4] : memref<1x1xf32, #tpu.memory_space<smem>>
    %7 = vector.broadcast %6 : f32 to vector<8x1xf32>
    %8 = arith.addf %5, %7 : vector<8x1xf32>
    %c0_5 = arith.constant 0 : index
    %c0_6 = arith.constant 0 : index
    %9 = vector.load %arg4[%c0_5, %c0_6] : memref<8x1xf32, #tpu.memory_space<vmem>>, vector<8x1xf32>
    tpu.vector_store %arg4[%c0_5, %c0_6], %8 {strides = array<i32>} : memref<8x1xf32, #tpu.memory_space<vmem>>, vector<8x1xf32>,
    return
  }
  func.func @transform_0(%arg0: i32) -> (i32, i32) {
    %c0_i32 = arith.constant 0 : i32
    %c0_i32_0 = arith.constant 0 : i32
    return %arg0, %c0_i32 : i32, i32
  }
  func.func @transform_1(%arg0: i32) -> (i32, i32) {
    %c0_i32 = arith.constant 0 : i32
    %c0_i32_0 = arith.constant 0 : i32
    %c0_i32_1 = arith.constant 0 : i32
    return %c0_i32, %c0_i32_0 : i32, i32
  }
  func.func @transform_2(%arg0: i32) -> (i32, i32) {
    %c0_i32 = arith.constant 0 : i32
    %c0_i32_0 = arith.constant 0 : i32
    %c0_i32_1 = arith.constant 0 : i32
    return %c0_i32, %c0_i32_0 : i32, i32
  }
  func.func @transform_3(%arg0: i32) -> (i32, i32) {
    %c0_i32 = arith.constant 0 : i32
    %c0_i32_0 = arith.constant 0 : i32
    return %arg0, %c0_i32 : i32, i32
  }
}

</mosaic_0001>

<llo_original>
// kernel: tpu_custom_call.1
$region0: #{tpu_custom_call.1}
  #allocation0 [shape = 'u32[]', space=smem, size = 0x4, offset = 0x4, fixed_abs, tag = 'smem constant byte address 0x4 - core index']
  #allocation1 [shape = 'u32[144,128]{1,0:T(1,128)}', space=vmem, size = 0x12000, scoped, tag = 'internal scratch']
  #allocation2 [shape = 'f32[1,1]{1,0:T(1,128)S(6)}', space=smem, size = 0x200, scoped, tag = 'scoped memory for tpu_custom_call.1']
  %s0 = inlined_call_operand.hbm [shape: f32[8,16], index: 0, kind: input, shape index: {}]
  %s1 = inlined_call_operand.vmem [shape: f32[1,16], index: 1, kind: input, shape index: {}]
  %s2 = inlined_call_operand.<no memory space> [shape: f32[1,1], index: 2, kind: input, shape index: {}]
  %s3 = inlined_call_operand.vmem [shape: f32[8,1], index: 3, kind: output, shape index: {}]
  %s4 = sld [smem:[#allocation0]]
  $region26: #{tpu_custom_call.1} parent=0
    _
  %s6 = ssub.s32 1, %s4
  %s7 = scalar_select 0, %s6, %s4
  %8 = sst [smem:[#allocation2]] %s2
  $region1: #{tpu_custom_call.1} parent=0
    #allocation3 [shape = 'u8[4096]{0}', space=vmem, size = 0x1000, scoped, tag = 'input window, operand 0, single buffered']
    #allocation4 [shape = 's32[1]{0}', space=sflag, size = 0x4, scoped, tag = 'scoped memory for tpu_custom_call.1']
    %9 = vsyncpa [#allocation4], 0
    // Predicated region
    $region2: #{tpu_custom_call.1} parent=1 // pred_check
      _
    $region3: #{tpu_custom_call.1} parent=1 // pred_check_branch
      %11 = sbr.rel (0) target = $region5
    $region4: #{tpu_custom_call.1} parent=1 // pred_region
      %s13 = ssub.s32 128, 128
      %14 = vsyncadd [#allocation4], %s13
      %s16 = sshll.u32 [#allocation3], 4
      %s17 = int_to_ptr.vmem [resolvable:$true] %s16
      %19 = dma.hbm_to_vmem [thread:$0]  %s0, 128, %s17, [#allocation4]
    $region5: #{tpu_custom_call.1} parent=1 // pred_fallthru
      _
    // Predicated region
    $region6: #{tpu_custom_call.1} parent=1 // pred_check
      _
    $region7: #{tpu_custom_call.1} parent=1 // pred_check_branch
      %21 = sbr.rel (0) target = $region9
    $region8: #{tpu_custom_call.1} parent=1 // pred_region
      _
    $region9: #{tpu_custom_call.1} parent=1 // pred_fallthru
      _
    // Predicated region
    $region10: #{tpu_custom_call.1} parent=1 // pred_check
      _
    $region11: #{tpu_custom_call.1} parent=1 // pred_check_branch
      %23 = sbr.rel (0) target = $region13
    $region12: #{tpu_custom_call.1} parent=1 // pred_region
      _
    $region13: #{tpu_custom_call.1} parent=1 // pred_fallthru
      _
    // Predicated region
    $region14: #{tpu_custom_call.1} parent=1 // pred_check
      _
    $region15: #{tpu_custom_call.1} parent=1 // pred_check_branch
      %25 = sbr.rel (0) target = $region17
    $region16: #{tpu_custom_call.1} parent=1 // pred_region
      %26 = dma.done [#allocation4], 128
    $region17: #{tpu_custom_call.1} parent=1 // pred_fallthru
      _
    %v27 = vld [vmem:[#allocation3] sm:$0xff]
    %v28 = vld [vmem:[%s1] sm:$0x1]
    %v30 = vlaneseq
    %v31 = vshrl.u32 %v30, 7
    %v32 = vsub.s32 0, %v31
    %v33 = vrot.slane %v28, %v32
    %v35 = vmul.f32 %v27, %v33
    %vm36 = vcmask 130048
    %v37 = vsel %vm36, %v35, 0.0
    %38 = vadd.xlane.f32.xlu0 %v37
    %v39 = vpop.xlane.xlu0 %38
    %s40 = sld [smem:[#allocation2]]
    %v41 = vstv %s40
    %v42 = vadd.f32 %v39, %v41
    %vm43 = vcmask 7168
    %44 = vst.msk [vmem:[%s3] sm:$0xff] %vm43, %v42
    // Predicated region
    $region18: #{tpu_custom_call.1} parent=1 // pred_check
      _
    $region19: #{tpu_custom_call.1} parent=1 // pred_check_branch
      %46 = sbr.rel (0) target = $region21
    $region20: #{tpu_custom_call.1} parent=1 // pred_region
      _
    $region21: #{tpu_custom_call.1} parent=1 // pred_fallthru
      _
    // Predicated region
    $region22: #{tpu_custom_call.1} parent=1 // pred_check
      _
    $region23: #{tpu_custom_call.1} parent=1 // pred_check_branch
      %48 = sbr.rel (0) target = $region25
    $region24: #{tpu_custom_call.1} parent=1 // pred_region
      _
    $region25: #{tpu_custom_call.1} parent=1 // pred_fallthru
      _
    %49 = vsyncpa [#allocation4], 1

</llo_original>
